<compile_context>
chip_gen: v5e
topology: v5e:2x2
jax: 0.10.0
libtpu: 0.0.40
codegen_flags: <defaults>
</compile_context>

<pallas_src>
import functools

import jax
import jax.numpy as jnp
from jax import lax
from jax.experimental import pallas as pl
from jax.experimental.pallas import tpu as pltpu


def _round_up(x, m):
    return ((x + m - 1) // m) * m


def _vmem_limit_bytes():
    """Scoped-VMEM limit derived per TPU generation (64 MiB on v7x, 128 MiB
    on v5e/v6e) with headroom; conservative fallback if the query fails."""
    try:
        info = pltpu.get_tpu_info()
        cap = getattr(info, "vmem_capacity_bytes", None)
        if cap:
            return int(min(int(cap * 0.75), 100 * 1024 * 1024))
    except Exception:
        pass
    return 48 * 1024 * 1024  # safe on every current generation


# ---------------------------------------------------------------------------
# Kernels
# ---------------------------------------------------------------------------

def _linear_kernel_f32(x_ref, w_ref, b_ref, o_ref, *, precision):
    # x:(tm,tk)  w:(tk,tn)  b:(1,tn) f32  o:(tm,tn) f32
    # Output block is resident across the K axis -> accumulate directly in it.
    k = pl.program_id(2)
    prod = jnp.dot(x_ref[...], w_ref[...],
                   preferred_element_type=jnp.float32, precision=precision)

    @pl.when(k == 0)
    def _():
        o_ref[...] = prod + b_ref[...]

    @pl.when(k != 0)
    def _():
        o_ref[...] += prod


def _linear_kernel_acc(x_ref, w_ref, b_ref, o_ref, acc_ref, *, precision):
    # Non-f32 outputs: f32 VMEM accumulator, cast once at the last K step.
    k = pl.program_id(2)
    prod = jnp.dot(x_ref[...], w_ref[...],
                   preferred_element_type=jnp.float32, precision=precision)

    @pl.when(k == 0)
    def _():
        acc_ref[...] = prod

    @pl.when(k != 0)
    def _():
        acc_ref[...] += prod

    @pl.when(k == pl.num_programs(2) - 1)
    def _():
        o_ref[...] = (acc_ref[...] + b_ref[...]).astype(o_ref.dtype)


# ---------------------------------------------------------------------------
# Wrappers
# ---------------------------------------------------------------------------

def prepare_grad_linear_params(weights, bias, compute_dtype=None):
    """One-time weight prep: transpose PyTorch-convention (out,in) -> (in,out)
    and optionally cast.  Cache the result across forward calls (W is a
    parameter reused every meta-learning step), so the transpose/cast HBM
    passes are not repeated per call."""
    w_kn = jnp.asarray(weights).T
    if compute_dtype is not None:
        w_kn = w_kn.astype(compute_dtype)
    return w_kn, jnp.asarray(bias)


@functools.partial(jax.jit, static_argnames=("tm", "tn", "tk", "precision"))
def grad_linear_forward_t(x, w_kn, bias, *, tm=512, tn=512, tk=1024,
                          precision=lax.Precision.DEFAULT):
    """y = x @ w_kn + bias, with w_kn already transposed to (in, out)."""
    in_features, out_features = w_kn.shape
    lead = x.shape[:-1]
    m = 1
    for d in lead:
        m *= d
    out_dtype = x.dtype

    x2d = x.reshape(m, in_features).astype(w_kn.dtype)

    # Tiny / lane-starved problems: per-grid-step overhead + lane padding
    # waste dominate -> plain XLA.
    if m < 8 or in_features < 128 or out_features < 128:
        y = jnp.dot(x2d, w_kn, preferred_element_type=jnp.float32,
                    precision=precision)
        y = (y + bias.astype(jnp.float32)).astype(out_dtype)
        return y.reshape(*lead, out_features)

    m8 = _round_up(m, 8)
    n128 = _round_up(out_features, 128)
    k128 = _round_up(in_features, 128)

    tm_e = min(tm, m8)
    tn_e = min(tn, n128)
    tk_e = min(tk, k128)

    mp = _round_up(m, tm_e)
    np_ = _round_up(out_features, tn_e)
    kp = _round_up(in_features, tk_e)

    # Guarantee >=2 parallel (M,N) tiles so both v7x TensorCores get work.
    if (mp // tm_e) * (np_ // tn_e) < 2:
        if n128 >= 256:
            tn_e = 128 * max(1, (n128 // 128) // 2)
            np_ = _round_up(out_features, tn_e)
        elif m8 >= 16:
            tm_e = 8 * max(1, (m8 // 8) // 2)
            mp = _round_up(m, tm_e)

    # Zero-pad to tile multiples (no-op for aligned shapes; zeros are exact
    # for the K reduction, padded M/N rows/cols are sliced off afterwards).
    if (mp, kp) != (m, in_features):
        x2d = jnp.pad(x2d, ((0, mp - m), (0, kp - in_features)))
    w = w_kn
    if (kp, np_) != (in_features, out_features):
        w = jnp.pad(w, ((0, kp - in_features), (0, np_ - out_features)))
    b2d = bias.reshape(1, out_features).astype(jnp.float32)
    if np_ != out_features:
        b2d = jnp.pad(b2d, ((0, 0), (0, np_ - out_features)))

    grid = (mp // tm_e, np_ // tn_e, kp // tk_e)

    if out_dtype == jnp.float32:
        kernel = functools.partial(_linear_kernel_f32, precision=precision)
        scratch = []
    else:
        kernel = functools.partial(_linear_kernel_acc, precision=precision)
        scratch = [pltpu.VMEM((tm_e, tn_e), jnp.float32)]

    # Bytes accounting includes the W / x re-streaming implied by grid order
    # (W refetched per M block, x per N block).
    cost = pl.CostEstimate(
        flops=2 * mp * np_ * kp,
        transcendentals=0,
        bytes_accessed=int(
            (mp // tm_e) * np_ * kp * w.dtype.itemsize
            + (np_ // tn_e) * mp * kp * x2d.dtype.itemsize
            + np_ * 4
            + mp * np_ * jnp.dtype(out_dtype).itemsize
        ),
    )

    out2d = pl.pallas_call(
        kernel,
        out_shape=jax.ShapeDtypeStruct((mp, np_), out_dtype),
        grid=grid,
        in_specs=[
            pl.BlockSpec((tm_e, tk_e), lambda i, j, k: (i, k)),   # x tile
            pl.BlockSpec((tk_e, tn_e), lambda i, j, k: (k, j)),   # W tile (K,N)
            pl.BlockSpec((1, tn_e), lambda i, j, k: (0, j)),      # bias row
        ],
        out_specs=pl.BlockSpec((tm_e, tn_e), lambda i, j, k: (i, j)),
        scratch_shapes=scratch,
        compiler_params=pltpu.CompilerParams(
            dimension_semantics=("parallel", "parallel", "arbitrary"),
            vmem_limit_bytes=_vmem_limit_bytes(),
        ),
        cost_estimate=cost,
    )(x2d, w, b2d)

    out2d = out2d[:m, :out_features]
    return out2d.reshape(*lead, out_features)


def grad_linear_forward(x, weights, bias, *, tm=512, tn=512, tk=1024,
                        precision=lax.Precision.DEFAULT, compute_dtype=None):
    """Convenience path taking PyTorch-convention weights (out, in).
    For repeated calls, use prepare_grad_linear_params() once and call
    grad_linear_forward_t() to avoid the per-call transpose/cast."""
    w_kn, b = prepare_grad_linear_params(weights, bias, compute_dtype)
    return grad_linear_forward_t(x, w_kn, b, tm=tm, tn=tn, tk=tk,
                                 precision=precision)


def init_grad_linear_params(key, in_features, out_features, dtype=jnp.float32):
    """Matches GradLinear.__init__: weight ~ N(0, sqrt(1/in_features)), bias=0."""
    wkey, _ = jax.random.split(key)
    std = (1.0 / in_features) ** 0.5
    weights = (
        jax.random.normal(wkey, (out_features, in_features), dtype=dtype) * std
    )
    bias = jnp.zeros((out_features,), dtype=dtype)
    return weights, bias


# TODO(synk): ModifiableModule's named_params/set_param/copy plumbing is
# host-side parameter bookkeeping with no kernel equivalent; only forward()
# is implemented as a Pallas kernel.

if __name__ == "__main__":
    key = jax.random.PRNGKey(0)
    kx, kp = jax.random.split(key)

    # Small but lane-dense shapes so the Pallas path (not the XLA fallback)
    # is exercised: M = batch*seq = 16, K = N = 256.
    batch, seq, in_features, out_features = 2, 8, 256, 256

    x = jax.random.normal(kx, (batch, seq, in_features), dtype=jnp.float32)
    weights, bias = init_grad_linear_params(kp, in_features, out_features)

    # Exact-ish reference (F.linear semantics).
    x2d = x.reshape(-1, in_features)
    ref = (
        lax.dot_general(
            x2d, weights,
            dimension_numbers=(((1,), (1,)), ((), ())),
            preferred_element_type=jnp.float32,
            precision=lax.Precision.HIGHEST,
        ) + bias
    ).reshape(batch, seq, out_features)

    # 1) Default path: single-pass MXU precision, f32 accumulate in o_ref.
    out = jax.block_until_ready(grad_linear_forward(x, weights, bias))
    assert out.shape == (batch, seq, out_features)
    assert jnp.allclose(out, ref, atol=3e-2, rtol=3e-2)

    # 2) HIGHEST precision path (tight tolerance).
    out_hi = jax.block_until_ready(
        grad_linear_forward(x, weights, bias, precision=lax.Precision.HIGHEST)
    )
    assert jnp.allclose(out_hi, ref, atol=1e-4, rtol=1e-4)

    # 3) K-split grid (exercises the o_ref accumulation across K steps).
    out_ks = jax.block_until_ready(grad_linear_forward(x, weights, bias, tk=128))
    assert jnp.allclose(out_ks, ref, atol=3e-2, rtol=3e-2)

    # 4) Cached prepared weights + bf16 compute (f32 accumulation).
    w_kn_bf16, b_prep = prepare_grad_linear_params(
        weights, bias, compute_dtype=jnp.bfloat16
    )
    out_bf = jax.block_until_ready(grad_linear_forward_t(x, w_kn_bf16, b_prep))
    assert jnp.allclose(out_bf, ref, atol=8e-2, rtol=8e-2)

    # 5) bf16 output dtype -> scratch-accumulator kernel variant.
    out_b16 = jax.block_until_ready(
        grad_linear_forward(x.astype(jnp.bfloat16),
                            weights.astype(jnp.bfloat16), bias)
    )
    assert out_b16.dtype == jnp.bfloat16
    assert jnp.allclose(out_b16.astype(jnp.float32), ref, atol=1e-1, rtol=1e-1)

    # 6) Tiny-shape XLA fallback still correct.
    x_small = x[:1, :4]  # m = 4 < 8
    out_small = jax.block_until_ready(grad_linear_forward(x_small, weights, bias))
    assert jnp.allclose(out_small, ref[:1, :4], atol=3e-2, rtol=3e-2)

    print("KERNEL_OK")
</pallas_src>

<mosaic_0001>
module attributes {stable_mosaic.version = 11 : i64} {
  func.func @_linear_kernel_f32(%arg0: i32, %arg1: i32, %arg2: i32, %arg3: memref<16x256xf32, #tpu.memory_space<vmem>>, %arg4: memref<256x128xf32, #tpu.memory_space<vmem>>, %arg5: memref<1x128xf32, #tpu.memory_space<vmem>>, %arg6: memref<16x128xf32, #tpu.memory_space<vmem>>) attributes {dimension_semantics = [#tpu.dimension_semantics<parallel>, #tpu.dimension_semantics<parallel>, #tpu.dimension_semantics<arbitrary>], iteration_bounds = array<i64: 1, 2, 1>, scalar_prefetch = 0 : i64, scratch_operands = 0 : i64, tpu.core_type = #tpu.core_type<tc>, window_params = [{transform_indices = @transform_0, window_bounds = array<i64: 16, 256>}, {transform_indices = @transform_1, window_bounds = array<i64: 256, 128>}, {transform_indices = @transform_2, window_bounds = array<i64: 1, 128>}, {transform_indices = @transform_3, window_bounds = array<i64: 16, 128>}]} {
    %c0 = arith.constant 0 : index
    %c0_0 = arith.constant 0 : index
    %0 = vector.load %arg3[%c0, %c0_0] : memref<16x256xf32, #tpu.memory_space<vmem>>, vector<16x256xf32>
    %c0_1 = arith.constant 0 : index
    %c0_2 = arith.constant 0 : index
    %1 = vector.load %arg4[%c0_1, %c0_2] : memref<256x128xf32, #tpu.memory_space<vmem>>, vector<256x128xf32>
    %cst = arith.constant dense<0.000000e+00> : vector<16x128xf32>
    %2 = tpu.matmul %0, %1, %cst {dimension_numbers = #tpu.dot_dimension_numbers<[1], [0], [0], [1], [0, 0, 1, 1], [], []>} : vector<16x256xf32>, vector<256x128xf32>, vector<16x128xf32> -> vector<16x128xf32>
    %c0_i32 = arith.constant 0 : i32
    %3 = arith.cmpi eq, %arg2, %c0_i32 : i32
    %4 = arith.extui %3 : i1 to i32
    %c0_i32_3 = arith.constant 0 : i32
    %5 = arith.cmpi ne, %4, %c0_i32_3 : i32
    scf.if %5 {
      %c0_6 = arith.constant 0 : index
      %c0_7 = arith.constant 0 : index
      %9 = vector.load %arg5[%c0_6, %c0_7] : memref<1x128xf32, #tpu.memory_space<vmem>>, vector<1x128xf32>
      %10 = vector.broadcast %9 : vector<1x128xf32> to vector<16x128xf32>
      %11 = arith.addf %2, %10 : vector<16x128xf32>
      %c0_8 = arith.constant 0 : index
      %c0_9 = arith.constant 0 : index
      %12 = vector.load %arg6[%c0_8, %c0_9] : memref<16x128xf32, #tpu.memory_space<vmem>>, vector<16x128xf32>
      tpu.vector_store %arg6[%c0_8, %c0_9], %11 {strides = array<i32>} : memref<16x128xf32, #tpu.memory_space<vmem>>, vector<16x128xf32>,
    } else {
    }
    %c0_i32_4 = arith.constant 0 : i32
    %6 = arith.cmpi ne, %arg2, %c0_i32_4 : i32
    %7 = arith.extui %6 : i1 to i32
    %c0_i32_5 = arith.constant 0 : i32
    %8 = arith.cmpi ne, %7, %c0_i32_5 : i32
    scf.if %8 {
      %c0_6 = arith.constant 0 : index
      %c0_7 = arith.constant 0 : index
      %9 = vector.load %arg6[%c0_6, %c0_7] : memref<16x128xf32, #tpu.memory_space<vmem>>, vector<16x128xf32>
      %10 = arith.addf %9, %2 : vector<16x128xf32>
      %c0_8 = arith.constant 0 : index
      %c0_9 = arith.constant 0 : index
      %11 = vector.load %arg6[%c0_8, %c0_9] : memref<16x128xf32, #tpu.memory_space<vmem>>, vector<16x128xf32>
      tpu.vector_store %arg6[%c0_8, %c0_9], %10 {strides = array<i32>} : memref<16x128xf32, #tpu.memory_space<vmem>>, vector<16x128xf32>,
    } else {
    }
    return
  }
  func.func @transform_0(%arg0: i32, %arg1: i32, %arg2: i32) -> (i32, i32) {
    %c0_i32 = arith.constant 0 : i32
    return %arg0, %arg2 : i32, i32
  }
  func.func @transform_1(%arg0: i32, %arg1: i32, %arg2: i32) -> (i32, i32) {
    %c0_i32 = arith.constant 0 : i32
    return %arg2, %arg1 : i32, i32
  }
  func.func @transform_2(%arg0: i32, %arg1: i32, %arg2: i32) -> (i32, i32) {
    %c0_i32 = arith.constant 0 : i32
    %c0_i32_0 = arith.constant 0 : i32
    return %c0_i32, %arg1 : i32, i32
  }
  func.func @transform_3(%arg0: i32, %arg1: i32, %arg2: i32) -> (i32, i32) {
    %c0_i32 = arith.constant 0 : i32
    return %arg0, %arg1 : i32, i32
  }
}

</mosaic_0001>

<llo_original>
// kernel: grad_linear_forward_t.1
$region0: #{grad_linear_forward_t.1}
  #allocation0 [shape = 'u32[]', space=smem, size = 0x4, offset = 0x4, fixed_abs, tag = 'smem constant byte address 0x4 - core index']
  #allocation1 [shape = 'u32[72,128]{1,0:T(1,128)}', space=vmem, size = 0x9000, scoped, tag = 'internal scratch']
  %s0 = inlined_call_operand.hbm [shape: f32[16,256], index: 0, kind: input, shape index: {}]
  %s1 = inlined_call_operand.hbm [shape: f32[256,256], index: 1, kind: input, shape index: {}]
  %s2 = inlined_call_operand.vmem [shape: f32[1,256], index: 2, kind: input, shape index: {}]
  %s3 = inlined_call_operand.hbm [shape: f32[16,256], index: 3, kind: output, shape index: {}]
  %s4 = sld [smem:[#allocation0]]
  $region61: #{grad_linear_forward_t.1} parent=0
    _
  %s6 = ssub.s32 1, %s4
  %s7 = scalar_select 0, %s6, %s4
  $region1: #{grad_linear_forward_t.1} parent=0
    #allocation2 [shape = 'u8[16384]{0}', space=vmem, size = 0x4000, scoped, tag = 'input window, operand 0, single buffered']
    #allocation3 [shape = 's32[2]{0}', space=sflag, size = 0x8, scoped, tag = 'scoped memory for grad_linear_forward_t.1']
    #allocation4 [shape = 's32[2]{0}', space=sflag, size = 0x8, scoped, tag = 'scoped memory for grad_linear_forward_t.1']
    #allocation5 [shape = 'u8[262144]{0}', space=vmem, size = 0x40000, scoped, tag = 'input window, operand 1']
    #allocation6 [shape = 's32[2]{0}', space=sflag, size = 0x8, scoped, tag = 'scoped memory for grad_linear_forward_t.1']
    #allocation7 [shape = 'u8[16384]{0}', space=vmem, size = 0x4000, scoped, tag = 'output window, operand 0']
    %8 = vsyncpa [#allocation3], 0
    %9 = vsyncpa [#allocation6], 0
    %s10 = scalar_lea.sflag [#allocation6], 1
    %11 = vsyncpa %s10, 0
    %12 = vsyncpa [#allocation4], 0
    %s13 = scalar_lea.sflag [#allocation4], 1
    %14 = vsyncpa %s13, 0
    loop: start=0, step=1, limit=4
    $region2: #{grad_linear_forward_t.1} parent=1 // loop_pre_header
      _
    $region3: #{grad_linear_forward_t.1} parent=1 // loop_header
      %s16 = sphi 0, %s20
      %p17 = scmp.ge.s32.totalorder %s16, 4
      %s23 = sphi 0, %s42
      %s24 = sphi 0, %s38
      %s25 = sphi 0, %s34
      %s26 = sphi 0, %s23
      %s27 = sphi 0, %s24
      %s28 = sphi 0, %s25
      %s29 = sphi 0, %s26
      %s30 = sphi 0, %s27
      %s31 = sphi 0, %s28
      %s47 = sphi 0, %s49
      %s50 = sphi 0, %s47
      %s51 = sphi 0, %s50
      %s67 = sphi 0, %s51
      %s75 = sphi 0, %s77
      %s78 = sphi 0, %s75
      %s79 = sphi 0, %s78
      %s95 = sphi 0, %s79
      %s101 = sphi 0, %s103
      %s104 = sphi 0, %s101
      %s105 = sphi 0, %s104
      %s121 = sphi 0, %s105
      %s129 = sphi 0, %s131
      %s132 = sphi 0, %s129
      %s133 = sphi 0, %s132
      %s149 = sphi 0, %s133
    $region4: #{grad_linear_forward_t.1} parent=1 // loop_header_branch
      %19 = sbr.rel (%p17) target = $region8
    $region5: #{grad_linear_forward_t.1} parent=1 // loop_body
      %s21 = ssub.s32 %s16, 1
      %s22 = ssub.s32 %s16, 2
      %s32 = sadd.s32 1, %s25
      %p33 = scmp.ge.s32.totalorder %s32, 1
      %s34 = scalar_select %p33, 0, %s32
      %s35 = sadd.s32 1, %s24
      %s36 = scalar_select %p33, %s35, %s24
      %p37 = scmp.ge.s32.totalorder %s36, 2
      %s38 = scalar_select %p37, 0, %s36
      %s39 = sadd.s32 1, %s23
      %s40 = scalar_select %p37, %s39, %s23
      %p41 = scmp.ge.s32.totalorder %s40, 1
      %s42 = scalar_select %p41, 0, %s40
      %s43 = ssub.s32 %s23, %s42
      %s44 = ssub.s32 %s25, %s34
      %s45 = sor.u32 %s43, %s44
      %p46 = scmp.eq.s32.totalorder %s45, 0
      %s48 = sadd.s32 %s47, 1
      %s49 = scalar_select %p46, %s47, %s48
      %p52 = pneg %p46
      %p53 = scmp.eq.s32.totalorder %s16, 1
      %p54 = por %p52, %p53
      %p55 = scmp.ne.s32.totalorder %s47, %s50
      %p56 = scmp.eq.s32.totalorder %s16, 0
      %p57 = por %p55, %p56
      %p58 = scmp.ne.s32.totalorder %s47, %s50
      %p59 = scmp.eq.s32.totalorder %s21, 1
      %p60 = por %p58, %p59
      %p61 = scmp.ne.s32.totalorder %s50, %s51
      %p62 = scmp.eq.s32.totalorder %s21, 0
      %p63 = por %p61, %p62
      %p64 = scmp.ne.s32.totalorder %s50, %s51
      %p65 = scmp.eq.s32.totalorder %s22, 1
      %p66 = por %p64, %p65
      %p68 = scmp.ne.s32.totalorder %s51, %s67
      %p69 = scmp.eq.s32.totalorder %s22, 0
      %p70 = por %p68, %p69
      %s71 = ssub.s32 %s25, %s34
      %s72 = ssub.s32 %s24, %s38
      %s73 = sor.u32 %s71, %s72
      %p74 = scmp.eq.s32.totalorder %s73, 0
      %s76 = sadd.s32 %s75, 1
      %s77 = scalar_select %p74, %s75, %s76
      %p80 = pneg %p74
      %p81 = scmp.eq.s32.totalorder %s16, 1
      %p82 = por %p80, %p81
      %p83 = scmp.ne.s32.totalorder %s75, %s78
      %p84 = scmp.eq.s32.totalorder %s16, 0
      %p85 = por %p83, %p84
      %p86 = scmp.ne.s32.totalorder %s75, %s78
      %p87 = scmp.eq.s32.totalorder %s21, 1
      %p88 = por %p86, %p87
      %p89 = scmp.ne.s32.totalorder %s78, %s79
      %p90 = scmp.eq.s32.totalorder %s21, 0
      %p91 = por %p89, %p90
      %p92 = scmp.ne.s32.totalorder %s78, %s79
      %p93 = scmp.eq.s32.totalorder %s22, 1
      %p94 = por %p92, %p93
      %p96 = scmp.ne.s32.totalorder %s79, %s95
      %p97 = scmp.eq.s32.totalorder %s22, 0
      %p98 = por %p96, %p97
      %s99 = ssub.s32 %s24, %s38
      %p100 = scmp.eq.s32.totalorder %s99, 0
      %s102 = sadd.s32 %s101, 1
      %s103 = scalar_select %p100, %s101, %s102
      %p106 = pneg %p100
      %p107 = scmp.eq.s32.totalorder %s16, 1
      %p108 = por %p106, %p107
      %p109 = scmp.ne.s32.totalorder %s101, %s104
      %p110 = scmp.eq.s32.totalorder %s16, 0
      %p111 = por %p109, %p110
      %p112 = scmp.ne.s32.totalorder %s101, %s104
      %p113 = scmp.eq.s32.totalorder %s21, 1
      %p114 = por %p112, %p113
      %p115 = scmp.ne.s32.totalorder %s104, %s105
      %p116 = scmp.eq.s32.totalorder %s21, 0
      %p117 = por %p115, %p116
      %p118 = scmp.ne.s32.totalorder %s104, %s105
      %p119 = scmp.eq.s32.totalorder %s22, 1
      %p120 = por %p118, %p119
      %p122 = scmp.ne.s32.totalorder %s105, %s121
      %p123 = scmp.eq.s32.totalorder %s22, 0
      %p124 = por %p122, %p123
      %s125 = ssub.s32 %s23, %s42
      %s126 = ssub.s32 %s24, %s38
      %s127 = sor.u32 %s125, %s126
      %p128 = scmp.eq.s32.totalorder %s127, 0
      %s130 = sadd.s32 %s129, 1
      %s131 = scalar_select %p128, %s129, %s130
      %p134 = pneg %p128
      %p135 = scmp.eq.s32.totalorder %s16, 1
      %p136 = por %p134, %p135
      %p137 = scmp.ne.s32.totalorder %s129, %s132
      %p138 = scmp.eq.s32.totalorder %s16, 0
      %p139 = por %p137, %p138
      %p140 = scmp.ne.s32.totalorder %s129, %s132
      %p141 = scmp.eq.s32.totalorder %s21, 1
      %p142 = por %p140, %p141
      %p143 = scmp.ne.s32.totalorder %s132, %s133
      %p144 = scmp.eq.s32.totalorder %s21, 0
      %p145 = por %p143, %p144
      %p146 = scmp.ne.s32.totalorder %s132, %s133
      %p147 = scmp.eq.s32.totalorder %s22, 1
      %p148 = por %p146, %p147
      %p150 = scmp.ne.s32.totalorder %s133, %s149
      %p151 = scmp.eq.s32.totalorder %s22, 0
      %p152 = por %p150, %p151
      %p153 = scmp.le.s32.totalorder 1, %s16
      %p154 = scmp.lt.s32.totalorder %s16, 3
      %p155 = pnand %p153, %p154
      %p156 = pneg %p155
      // Predicated region
      $region9: #{grad_linear_forward_t.1} parent=5 // pred_check
        _
      $region10: #{grad_linear_forward_t.1} parent=5 // pred_check_branch
        %158 = sbr.rel (%p155) target = $region12
      $region11: #{grad_linear_forward_t.1} parent=5 // pred_region
        %s159 = ssub.s32 %s16, 1
        // Predicated region
        $region13: #{grad_linear_forward_t.1} parent=11 // pred_check
          %p160 = pneg %p63
        $region14: #{grad_linear_forward_t.1} parent=11 // pred_check_branch
          %162 = sbr.rel (%p160) target = $region16
        $region15: #{grad_linear_forward_t.1} parent=11 // pred_region
          %s163 = smul.u32 2, %s26
          %s164 = smul.u32 2, %s28
          %166 = vsyncadd [#allocation3], 0
          %s167 = smul.addr %s163, 2
          %s168 = sadd.s32 %s164, %s167
          %s169 = smul.addr %s168, 8
          %s170 = scalar_lea.hbm %s0, %s169
          %s171 = sshll.u32 %s170, 4
          %s172 = int_to_ptr.hbm [resolvable:$true] %s171
          %s173 = sshll.u32 [#allocation2], 4
          %s174 = int_to_ptr.vmem [resolvable:$true] %s173
          %179 = dma.hbm_to_vmem [thread:$0]  %s172, 512, %s174, [#allocation3], 256, 256, 16
        $region16: #{grad_linear_forward_t.1} parent=11 // pred_fallthru
          _
      $region12: #{grad_linear_forward_t.1} parent=5 // pred_fallthru
        _
      %p180 = scmp.lt.s32.totalorder %s16, 2
      // Predicated region
      $region17: #{grad_linear_forward_t.1} parent=5 // pred_check
        %p181 = pneg %p180
      $region18: #{grad_linear_forward_t.1} parent=5 // pred_check_branch
        %183 = sbr.rel (%p181) target = $region20
      $region19: #{grad_linear_forward_t.1} parent=5 // pred_region
        // Predicated region
        $region21: #{grad_linear_forward_t.1} parent=19 // pred_check
          %p184 = pneg %p85
        $region22: #{grad_linear_forward_t.1} parent=19 // pred_check_branch
          %186 = sbr.rel (%p184) target = $region24
        $region23: #{grad_linear_forward_t.1} parent=19 // pred_region
          %s187 = sand.u32 %s75, 1
          %s188 = scalar_lea.sflag [#allocation6], %s187
          %s189 = sand.u32 %s75, 1
          %s190 = smul.addr %s189, 256
          %s191 = scalar_lea.vmem [#allocation5], %s190
          %s192 = smul.u32 32, %s25
          %194 = vsyncadd %s188, 0
          %s195 = smul.addr %s192, 2
          %s196 = sadd.s32 %s24, %s195
          %s197 = smul.addr %s196, 8
          %s198 = scalar_lea.hbm %s1, %s197
          %s199 = sshll.u32 %s198, 4
          %s200 = int_to_ptr.hbm [resolvable:$true] %s199
          %s201 = sshll.u32 %s191, 4
          %s202 = int_to_ptr.vmem [resolvable:$true] %s201
          %207 = dma.hbm_to_vmem [thread:$0]  %s200, 4096, %s202, %s188, 256, 128, 8
        $region24: #{grad_linear_forward_t.1} parent=19 // pred_fallthru
          _
        // Predicated region
        $region25: #{grad_linear_forward_t.1} parent=19 // pred_check
          %p208 = pneg %p111
        $region26: #{grad_linear_forward_t.1} parent=19 // pred_check_branch
          %210 = sbr.rel (%p208) target = $region28
        $region27: #{grad_linear_forward_t.1} parent=19 // pred_region
          %p211 = scmp.lt.s32.totalorder %s24, 1
          %s212 = scalar_select %p211, %s24, 1
          %s213 = scalar_lea.vmem %s2, %s212
        $region28: #{grad_linear_forward_t.1} parent=19 // pred_fallthru
          _
      $region20: #{grad_linear_forward_t.1} parent=5 // pred_fallthru
        _
      %p214 = scmp.le.s32.totalorder 1, %s16
      %p215 = scmp.lt.s32.totalorder %s16, 3
      %p216 = pnand %p214, %p215
      %p217 = pneg %p216
      // Predicated region
      $region29: #{grad_linear_forward_t.1} parent=5 // pred_check
        _
      $region30: #{grad_linear_forward_t.1} parent=5 // pred_check_branch
        %219 = sbr.rel (%p216) target = $region32
      $region31: #{grad_linear_forward_t.1} parent=5 // pred_region
        %s220 = ssub.s32 %s16, 1
        // Predicated region
        $region33: #{grad_linear_forward_t.1} parent=31 // pred_check
          %p221 = pneg %p63
        $region34: #{grad_linear_forward_t.1} parent=31 // pred_check_branch
          %223 = sbr.rel (%p221) target = $region36
        $region35: #{grad_linear_forward_t.1} parent=31 // pred_region
          %225 = dma.done [#allocation3], 512
        $region36: #{grad_linear_forward_t.1} parent=31 // pred_fallthru
          _
        %s226 = sand.u32 %s78, 1
        %s227 = scalar_lea.sflag [#allocation6], %s226
        %s228 = sand.u32 %s78, 1
        %s229 = smul.addr %s228, 256
        %s230 = scalar_lea.vmem [#allocation5], %s229
        // Predicated region
        $region37: #{grad_linear_forward_t.1} parent=31 // pred_check
          %p231 = pneg %p91
        $region38: #{grad_linear_forward_t.1} parent=31 // pred_check_branch
          %233 = sbr.rel (%p231) target = $region40
        $region39: #{grad_linear_forward_t.1} parent=31 // pred_region
          %235 = dma.done %s227, 4096
        $region40: #{grad_linear_forward_t.1} parent=31 // pred_fallthru
          _
        %p236 = pneg %p63
        %p237 = pneg %p60
        %s238 = sand.u32 %s78, 1
        %s239 = scalar_lea.sflag [#allocation6], %s238
        %s240 = sand.u32 %s78, 1
        %s241 = smul.addr %s240, 256
        %s242 = scalar_lea.vmem [#allocation5], %s241
        %p243 = pneg %p91
        %p244 = pneg %p88
        %p245 = scmp.lt.s32.totalorder %s27, 1
        %s246 = scalar_select %p245, %s27, 1
        %s247 = scalar_lea.vmem %s2, %s246
        %p248 = pneg %p117
        %p249 = pneg %p114
        %p250 = pneg %p145
        %p251 = pneg %p142
        %s252 = sand.u32 %s132, 1
        %s253 = scalar_lea.sflag [#allocation4], %s252
        %s254 = sand.u32 %s132, 1
        %s255 = smul.addr %s254, 16
        %s256 = scalar_lea.vmem [#allocation7], %s255
        %s257 = smul.u32 2, %s26
        %s258 = smul.u32 2, %s28
        %s259 = smul.u32 32, %s28
        %p260 = scmp.lt.s32.totalorder %s27, 1
        %s261 = scalar_select %p260, %s27, 1
        %s262 = scalar_lea.vmem %s2, %s261
        %s263 = smul.u32 2, %s26
        %v264 = vld [vmem:[#allocation2] sm:$0xff]
        %v265 = vld [vmem:[#allocation2 + $0x8] sm:$0xff]
        %v266 = vld [vmem:[#allocation2 + $0x10] sm:$0xff]
        %v267 = vld [vmem:[#allocation2 + $0x18] sm:$0xff]
        %v268 = vld [vmem:[%s230] sm:$0xff]
        %v269 = vld [vmem:[%s230 + $0x8] sm:$0xff]
        %v270 = vld [vmem:[%s230 + $0x10] sm:$0xff]
        %v271 = vld [vmem:[%s230 + $0x18] sm:$0xff]
        %v272 = vld [vmem:[%s230 + $0x20] sm:$0xff]
        %v273 = vld [vmem:[%s230 + $0x28] sm:$0xff]
        %v274 = vld [vmem:[%s230 + $0x30] sm:$0xff]
        %v275 = vld [vmem:[%s230 + $0x38] sm:$0xff]
        %v276 = vld [vmem:[%s230 + $0x40] sm:$0xff]
        %v277 = vld [vmem:[%s230 + $0x48] sm:$0xff]
        %v278 = vld [vmem:[%s230 + $0x50] sm:$0xff]
        %v279 = vld [vmem:[%s230 + $0x58] sm:$0xff]
        %v280 = vld [vmem:[%s230 + $0x60] sm:$0xff]
        %v281 = vld [vmem:[%s230 + $0x68] sm:$0xff]
        %v282 = vld [vmem:[%s230 + $0x70] sm:$0xff]
        %v283 = vld [vmem:[%s230 + $0x78] sm:$0xff]
        %v284 = vld [vmem:[%s230 + $0x80] sm:$0xff]
        %v285 = vld [vmem:[%s230 + $0x88] sm:$0xff]
        %v286 = vld [vmem:[%s230 + $0x90] sm:$0xff]
        %v287 = vld [vmem:[%s230 + $0x98] sm:$0xff]
        %v288 = vld [vmem:[%s230 + $0xa0] sm:$0xff]
        %v289 = vld [vmem:[%s230 + $0xa8] sm:$0xff]
        %v290 = vld [vmem:[%s230 + $0xb0] sm:$0xff]
        %v291 = vld [vmem:[%s230 + $0xb8] sm:$0xff]
        %v292 = vld [vmem:[%s230 + $0xc0] sm:$0xff]
        %v293 = vld [vmem:[%s230 + $0xc8] sm:$0xff]
        %v294 = vld [vmem:[%s230 + $0xd0] sm:$0xff]
        %v295 = vld [vmem:[%s230 + $0xd8] sm:$0xff]
        %v296 = vld [vmem:[%s230 + $0xe0] sm:$0xff]
        %v297 = vld [vmem:[%s230 + $0xe8] sm:$0xff]
        %v298 = vld [vmem:[%s230 + $0xf0] sm:$0xff]
        %v299 = vld [vmem:[%s230 + $0xf8] sm:$0xff]
        %300 = vmatpush.msra.mxu0 %v283
        %301 = vmatpush.msra.mxu0 %v282
        %302 = vmatpush.msra.mxu0 %v281
        %303 = vmatpush.msra.mxu0 %v280
        %304 = vmatpush.msra.mxu0 %v279
        %305 = vmatpush.msra.mxu0 %v278
        %306 = vmatpush.msra.mxu0 %v277
        %307 = vmatpush.msra.mxu0 %v276
        %308 = vmatpush.msra.mxu0 %v275
        %309 = vmatpush.msra.mxu0 %v274
        %310 = vmatpush.msra.mxu0 %v273
        %311 = vmatpush.msra.mxu0 %v272
        %312 = vmatpush.msra.mxu0 %v271
        %313 = vmatpush.msra.mxu0 %v270
        %314 = vmatpush.msra.mxu0 %v269
        %315 = vmatpush.msra.mxu0 %v268
        %316 = vmatmul.f32.gmra.mxu0 %v264
        %v317 = vpop.f32.mrf.mxu0
        %v318 = vadd.f32 0.0, %v317
        %319 = vmatmul.f32.gmra.mxu0 %v266
        %v320 = vpop.f32.mrf.mxu0
        %v321 = vadd.f32 0.0, %v320
        %322 = vdwg.mxu0
        %323 = vmatpush.msra.mxu0 %v299
        %324 = vmatpush.msra.mxu0 %v298
        %325 = vmatpush.msra.mxu0 %v297
        %326 = vmatpush.msra.mxu0 %v296
        %327 = vmatpush.msra.mxu0 %v295
        %328 = vmatpush.msra.mxu0 %v294
        %329 = vmatpush.msra.mxu0 %v293
        %330 = vmatpush.msra.mxu0 %v292
        %331 = vmatpush.msra.mxu0 %v291
        %332 = vmatpush.msra.mxu0 %v290
        %333 = vmatpush.msra.mxu0 %v289
        %334 = vmatpush.msra.mxu0 %v288
        %335 = vmatpush.msra.mxu0 %v287
        %336 = vmatpush.msra.mxu0 %v286
        %337 = vmatpush.msra.mxu0 %v285
        %338 = vmatpush.msra.mxu0 %v284
        %339 = vmatmul.f32.gmra.mxu0 %v265
        %v340 = vpop.f32.mrf.mxu0
        %v341 = vadd.f32 %v318, %v340
        %342 = vmatmul.f32.gmra.mxu0 %v267
        %v343 = vpop.f32.mrf.mxu0
        %v344 = vadd.f32 %v321, %v343
        %345 = vdwg.mxu0
        %p346 = scmp.eq.s32.totalorder %s28, 0
        // Predicated region
        $region41: #{grad_linear_forward_t.1} parent=31 // pred_check
          %p347 = pneg %p346
        $region42: #{grad_linear_forward_t.1} parent=31 // pred_check_branch
          %349 = sbr.rel (%p347) target = $region44
        $region43: #{grad_linear_forward_t.1} parent=31 // pred_region
          %v350 = vld [vmem:[%s262] sm:$0x1]
          %v352 = vperm.slane %v350, 0
          %v354 = vadd.f32 %v341, %v352
          %v355 = vadd.f32 %v344, %v352
          %356 = vst [vmem:[%s256] sm:$0xff] %v354
          %357 = vst [vmem:[%s256 + $0x8] sm:$0xff] %v355
        $region44: #{grad_linear_forward_t.1} parent=31 // pred_fallthru
          _
        %p358 = scmp.ne.s32.totalorder %s28, 0
        // Predicated region
        $region45: #{grad_linear_forward_t.1} parent=31 // pred_check
          %p359 = pneg %p358
        $region46: #{grad_linear_forward_t.1} parent=31 // pred_check_branch
          %361 = sbr.rel (%p359) target = $region48
        $region47: #{grad_linear_forward_t.1} parent=31 // pred_region
          %v362 = vld [vmem:[%s256] sm:$0xff]
          %v363 = vld [vmem:[%s256 + $0x8] sm:$0xff]
          %v364 = vadd.f32 %v362, %v341
          %v365 = vadd.f32 %v363, %v344
          %366 = vst [vmem:[%s256] sm:$0xff] %v364
          %367 = vst [vmem:[%s256 + $0x8] sm:$0xff] %v365
        $region48: #{grad_linear_forward_t.1} parent=31 // pred_fallthru
          _
        %s368 = sand.u32 %s132, 1
        %s369 = scalar_lea.sflag [#allocation4], %s368
        %s370 = sand.u32 %s132, 1
        %s371 = smul.addr %s370, 16
        %s372 = scalar_lea.vmem [#allocation7], %s371
        // Predicated region
        $region49: #{grad_linear_forward_t.1} parent=31 // pred_check
          %p373 = pneg %p142
        $region50: #{grad_linear_forward_t.1} parent=31 // pred_check_branch
          %375 = sbr.rel (%p373) target = $region52
        $region51: #{grad_linear_forward_t.1} parent=31 // pred_region
          %s376 = smul.u32 2, %s26
          %378 = vsyncadd %s369, 0
          %s379 = smul.addr %s376, 2
          %s380 = sadd.s32 %s27, %s379
          %s381 = smul.addr %s380, 8
          %s382 = scalar_lea.hbm %s3, %s381
          %s383 = sshll.u32 %s372, 4
          %s384 = int_to_ptr.vmem [resolvable:$true] %s383
          %s385 = sshll.u32 %s382, 4
          %s386 = int_to_ptr.hbm [resolvable:$true] %s385
          %391 = dma.vmem_to_hbm [thread:$0]  %s384, 256, %s386, %s369, 128, 256, 8
        $region52: #{grad_linear_forward_t.1} parent=31 // pred_fallthru
          _
      $region32: #{grad_linear_forward_t.1} parent=5 // pred_fallthru
        _
      %p392 = scmp.le.s32.totalorder 2, %s16
      // Predicated region
      $region53: #{grad_linear_forward_t.1} parent=5 // pred_check
        %p393 = pneg %p392
      $region54: #{grad_linear_forward_t.1} parent=5 // pred_check_branch
        %395 = sbr.rel (%p393) target = $region56
      $region55: #{grad_linear_forward_t.1} parent=5 // pred_region
        %s396 = ssub.s32 %s16, 2
        // Predicated region
        $region57: #{grad_linear_forward_t.1} parent=55 // pred_check
          %p397 = pneg %p148
        $region58: #{grad_linear_forward_t.1} parent=55 // pred_check_branch
          %399 = sbr.rel (%p397) target = $region60
        $region59: #{grad_linear_forward_t.1} parent=55 // pred_region
          %s400 = sand.u32 %s133, 1
          %s401 = scalar_lea.sflag [#allocation4], %s400
          %s402 = sand.u32 %s133, 1
          %s403 = smul.addr %s402, 16
          %s404 = scalar_lea.vmem [#allocation7], %s403
          %406 = dma.done %s401, 256
        $region60: #{grad_linear_forward_t.1} parent=55 // pred_fallthru
          _
      $region56: #{grad_linear_forward_t.1} parent=5 // pred_fallthru
        _
    $region6: #{grad_linear_forward_t.1} parent=1 // loop_footer
      %s20 = sadd.s32 1, %s16
    $region7: #{grad_linear_forward_t.1} parent=1 // loop_footer_branch
      %15 = sbr.rel target = $region3
    $region8: #{grad_linear_forward_t.1} parent=1 // loop_exit
      _
    %407 = vsyncpa [#allocation3], 1
    %s408 = scalar_lea.sflag [#allocation3], 1
    %409 = vsyncpa %s408, 1
    %410 = vsyncpa [#allocation6], 1
    %s411 = scalar_lea.sflag [#allocation6], 1
    %412 = vsyncpa %s411, 1
    %413 = vsyncpa [#allocation4], 1
    %s414 = scalar_lea.sflag [#allocation4], 1
    %415 = vsyncpa %s414, 1

</llo_original>
